<compile_context>
chip_gen: v6e
topology: v6e:2x2x1
jax: 0.10.0
libtpu: 0.0.40
codegen_flags: <defaults>
</compile_context>

<pallas_src>
import jax
import jax.numpy as jnp
from jax.experimental import pallas as pl
from jax.experimental.pallas import tpu as pltpu


def _rezero_kernel(alpha_ref, x_ref, h_ref, o_ref):
    # alpha_ref: (1,) f32 in SMEM; x/h/o: VMEM tiles.
    alpha = alpha_ref[0]
    x = x_ref[...].astype(jnp.float32)
    h = h_ref[...].astype(jnp.float32)
    o_ref[...] = (x + alpha * h).astype(o_ref.dtype)


def _sublane_multiple(dtype) -> int:
    # Sub-32-bit dtypes pack along sublanes: 8 rows f32, 16 bf16, 32 int8/fp8.
    itemsize = jnp.dtype(dtype).itemsize
    return max(8, 32 // max(itemsize, 1))


def _rezero_pallas_2d(alpha_f32, x2, h2, out_dtype, donate_x):
    rows, width = x2.shape
    in_itemsize = jnp.dtype(x2.dtype).itemsize + jnp.dtype(h2.dtype).itemsize
    out_itemsize = jnp.dtype(out_dtype).itemsize

    # ~4 MiB per input buffer; rows aligned to the dtype's sublane packing.
    sub = _sublane_multiple(x2.dtype)
    target_bytes = 4 << 20
    if rows <= sub:
        # Full first-dim block: exempt from the (8,128) divisibility rule.
        tile_rows = rows
    else:
        tile_rows = max(sub, target_bytes // (width * jnp.dtype(x2.dtype).itemsize))
        tile_rows = min(tile_rows, rows)
        tile_rows -= tile_rows % sub

    grid = (pl.cdiv(rows, tile_rows),)
    total = rows * width

    aliases = {}
    if donate_x and x2.dtype == out_dtype:
        # pallas_call inputs are (alpha, x2, h2) -> x2 is input index 1.
        aliases = {1: 0}

    return pl.pallas_call(
        _rezero_kernel,
        out_shape=jax.ShapeDtypeStruct((rows, width), out_dtype),
        grid_spec=pltpu.PrefetchScalarGridSpec(
            num_scalar_prefetch=0,
            grid=grid,
            in_specs=[
                pl.BlockSpec(memory_space=pltpu.MemorySpace.SMEM),   # alpha (1,) f32
                pl.BlockSpec((tile_rows, width), lambda i: (i, 0)),  # x tile
                pl.BlockSpec((tile_rows, width), lambda i: (i, 0)),  # h tile
            ],
            out_specs=pl.BlockSpec((tile_rows, width), lambda i: (i, 0)),
        ),
        compiler_params=pltpu.CompilerParams(
            dimension_semantics=("parallel",),   # shard loop over v7x's 2 TCs
            vmem_limit_bytes=32 << 20,           # covers 24 MiB even on v5e's 16 MiB default
        ),
        cost_estimate=pl.CostEstimate(
            flops=2 * total,
            transcendentals=0,
            bytes_accessed=total * (in_itemsize + out_itemsize),
        ),
        input_output_aliases=aliases,
    )(alpha_f32, x2, h2)


def rezero_residual(x: jax.Array, h: jax.Array, alpha: jax.Array,
                    donate_x: bool = False) -> jax.Array:
    """y = x + alpha * h, elementwise; alpha is a learnable scalar (shape (1,) or ())."""
    assert x.shape == h.shape, "x and h must have identical shapes"
    orig_shape = x.shape
    total = x.size
    out_dtype = jnp.result_type(x.dtype, h.dtype)
    alpha_f32 = jnp.asarray(alpha, dtype=jnp.float32).reshape(1)

    # Split into a 128-aligned prefix (Pallas) and a <=127-element tail (XLA).
    main = (total // 128) * 128
    tail = total - main

    if main == 0:
        # Tiny array: not worth a kernel launch; plain XLA is exact and cheap.
        y = (x.astype(jnp.float32) + alpha_f32[0] * h.astype(jnp.float32))
        return y.astype(out_dtype)

    x_flat = x.reshape(-1)
    h_flat = h.reshape(-1)

    # Pick the widest lane-dense width that divides the aligned prefix.
    width = 128
    for cand in (1024, 512, 256):
        if main % cand == 0:
            width = cand
            break
    rows = main // width

    x_main = x_flat if tail == 0 else x_flat[:main]
    h_main = h_flat if tail == 0 else h_flat[:main]
    out_main = _rezero_pallas_2d(
        alpha_f32, x_main.reshape(rows, width), h_main.reshape(rows, width),
        out_dtype, donate_x and tail == 0,
    )

    if tail == 0:
        return out_main.reshape(orig_shape)

    # Small tail handled by XLA (no padded copies of x/h, no output slice pass).
    tail_y = (x_flat[main:].astype(jnp.float32)
              + alpha_f32[0] * h_flat[main:].astype(jnp.float32)).astype(out_dtype)
    out_flat = jnp.concatenate([out_main.reshape(-1), tail_y])
    return out_flat.reshape(orig_shape)


if __name__ == "__main__":
    key = jax.random.PRNGKey(0)
    kx, kh = jax.random.split(key)

    # Small NCHW-shaped inputs (ReZero is layout-agnostic elementwise math).
    B, C, H, W = 2, 4, 16, 16
    x = jax.random.normal(kx, (B, C, H, W), dtype=jnp.float32)
    h = jax.random.normal(kh, (B, C, H, W), dtype=jnp.float32)

    # Parameter: alpha initialised to zero, as in nn.Parameter(torch.zeros(1)).
    alpha = jnp.zeros((1,), dtype=jnp.float32)

    y = rezero_residual(x, h, alpha)
    jax.block_until_ready(y)
    assert y.shape == x.shape and y.dtype == x.dtype
    assert jnp.allclose(y, x), "alpha=0 case mismatch"

    # Nonzero alpha reference check.
    alpha2 = jnp.array([0.37], dtype=jnp.float32)
    y2 = rezero_residual(x, h, alpha2)
    jax.block_until_ready(y2)
    ref = x + alpha2[0] * h
    assert jnp.allclose(y2, ref, atol=1e-6), "nonzero alpha mismatch"

    # Ragged / non-128-multiple shape exercises the aligned-prefix + XLA-tail path.
    xr = jax.random.normal(kx, (2, 3, 5, 7), dtype=jnp.float32)
    hr = jax.random.normal(kh, (2, 3, 5, 7), dtype=jnp.float32)
    yr = rezero_residual(xr, hr, alpha2)
    jax.block_until_ready(yr)
    assert jnp.allclose(yr, xr + alpha2[0] * hr, atol=1e-6), "ragged shape mismatch"

    # Mixed-precision residual (bf16 branch output into f32 stream).
    hb = h.astype(jnp.bfloat16)
    ym = rezero_residual(x, hb, alpha2)
    jax.block_until_ready(ym)
    refm = x + alpha2[0] * hb.astype(jnp.float32)
    assert jnp.allclose(ym, refm, atol=1e-2), "mixed-precision mismatch"

    print("KERNEL_OK")
</pallas_src>

<mosaic_0001>
module attributes {stable_mosaic.version = 11 : i64} {
  func.func @_rezero_kernel(%arg0: i32, %arg1: memref<1xf32, #tpu.memory_space<smem>>, %arg2: memref<2x1024xf32, #tpu.memory_space<vmem>>, %arg3: memref<2x1024xf32, #tpu.memory_space<vmem>>, %arg4: memref<2x1024xf32, #tpu.memory_space<vmem>>) attributes {dimension_semantics = [#tpu.dimension_semantics<parallel>], iteration_bounds = array<i64: 1>, scalar_prefetch = 0 : i64, scratch_operands = 0 : i64, tpu.core_type = #tpu.core_type<tc>, window_params = [{transform_indices = @transform_0, window_bounds = array<i64: 1>}, {transform_indices = @transform_1, window_bounds = array<i64: 2, 1024>}, {transform_indices = @transform_2, window_bounds = array<i64: 2, 1024>}, {transform_indices = @transform_3, window_bounds = array<i64: 2, 1024>}]} {
    %c0 = arith.constant 0 : index
    %0 = memref.load %arg1[%c0] : memref<1xf32, #tpu.memory_space<smem>>
    %c0_0 = arith.constant 0 : index
    %c0_1 = arith.constant 0 : index
    %1 = vector.load %arg2[%c0_0, %c0_1] : memref<2x1024xf32, #tpu.memory_space<vmem>>, vector<2x1024xf32>
    %c0_2 = arith.constant 0 : index
    %c0_3 = arith.constant 0 : index
    %2 = vector.load %arg3[%c0_2, %c0_3] : memref<2x1024xf32, #tpu.memory_space<vmem>>, vector<2x1024xf32>
    %3 = vector.broadcast %0 : f32 to vector<2x1024xf32>
    %4 = arith.mulf %3, %2 : vector<2x1024xf32>
    %5 = arith.addf %1, %4 : vector<2x1024xf32>
    %c0_4 = arith.constant 0 : index
    %c0_5 = arith.constant 0 : index
    %6 = vector.load %arg4[%c0_4, %c0_5] : memref<2x1024xf32, #tpu.memory_space<vmem>>, vector<2x1024xf32>
    tpu.vector_store %arg4[%c0_4, %c0_5], %5 {strides = array<i32>} : memref<2x1024xf32, #tpu.memory_space<vmem>>, vector<2x1024xf32>,
    return
  }
  func.func @transform_0(%arg0: i32) -> i32 {
    %c0_i32 = arith.constant 0 : i32
    %c0_i32_0 = arith.constant 0 : i32
    return %c0_i32 : i32
  }
  func.func @transform_1(%arg0: i32) -> (i32, i32) {
    %c0_i32 = arith.constant 0 : i32
    %c0_i32_0 = arith.constant 0 : i32
    return %arg0, %c0_i32 : i32, i32
  }
  func.func @transform_2(%arg0: i32) -> (i32, i32) {
    %c0_i32 = arith.constant 0 : i32
    %c0_i32_0 = arith.constant 0 : i32
    return %arg0, %c0_i32 : i32, i32
  }
  func.func @transform_3(%arg0: i32) -> (i32, i32) {
    %c0_i32 = arith.constant 0 : i32
    %c0_i32_0 = arith.constant 0 : i32
    return %arg0, %c0_i32 : i32, i32
  }
}

</mosaic_0001>

<llo_original>
// kernel: tpu_custom_call.1
$region0: #{tpu_custom_call.1}
  #allocation0 [shape = 'u32[]', space=smem, size = 0x4, offset = 0x4, fixed_abs, tag = 'smem constant byte address 0x4 - core index']
  #allocation1 [shape = 'u32[144,128]{1,0:T(1,128)}', space=vmem, size = 0x12000, scoped, tag = 'internal scratch']
  #allocation2 [shape = 'f32[1]{0:T(128)S(6)}', space=smem, size = 0x200, scoped, tag = 'scoped memory for tpu_custom_call.1']
  %s0 = inlined_call_operand.<no memory space> [shape: f32[1], index: 0, kind: input, shape index: {}]
  %s1 = inlined_call_operand.hbm [shape: f32[2,1024], index: 1, kind: input, shape index: {}]
  %s2 = inlined_call_operand.hbm [shape: f32[2,1024], index: 2, kind: input, shape index: {}]
  %s3 = inlined_call_operand.hbm [shape: f32[2,1024], index: 3, kind: output, shape index: {}]
  %s4 = sld [smem:[#allocation0]]
  $region30: #{tpu_custom_call.1} parent=0
    _
  %s6 = ssub.s32 1, %s4
  %s7 = scalar_select 0, %s6, %s4
  %8 = sst [smem:[#allocation2]] %s0
  $region1: #{tpu_custom_call.1} parent=0
    #allocation3 [shape = 'u8[8192]{0}', space=vmem, size = 0x2000, scoped, tag = 'input window, operand 1, single buffered']
    #allocation4 [shape = 's32[1]{0}', space=sflag, size = 0x4, scoped, tag = 'scoped memory for tpu_custom_call.1']
    #allocation5 [shape = 's32[1]{0}', space=sflag, size = 0x4, scoped, tag = 'scoped memory for tpu_custom_call.1']
    #allocation6 [shape = 'u8[8192]{0}', space=vmem, size = 0x2000, scoped, tag = 'input window, operand 2, single buffered']
    #allocation7 [shape = 's32[1]{0}', space=sflag, size = 0x4, scoped, tag = 'scoped memory for tpu_custom_call.1']
    #allocation8 [shape = 'u8[8192]{0}', space=vmem, size = 0x2000, scoped, tag = 'output window, operand 0, single buffered']
    %9 = vsyncpa [#allocation4], 0
    %10 = vsyncpa [#allocation7], 0
    %11 = vsyncpa [#allocation5], 0
    // Predicated region
    $region2: #{tpu_custom_call.1} parent=1 // pred_check
      _
    $region3: #{tpu_custom_call.1} parent=1 // pred_check_branch
      %13 = sbr.rel (0) target = $region5
    $region4: #{tpu_custom_call.1} parent=1 // pred_region
      _
    $region5: #{tpu_custom_call.1} parent=1 // pred_fallthru
      _
    // Predicated region
    $region6: #{tpu_custom_call.1} parent=1 // pred_check
      _
    $region7: #{tpu_custom_call.1} parent=1 // pred_check_branch
      %15 = sbr.rel (0) target = $region9
    $region8: #{tpu_custom_call.1} parent=1 // pred_region
      %s17 = ssub.s32 256, 256
      %18 = vsyncadd [#allocation4], %s17
      %s20 = sshll.u32 [#allocation3], 4
      %s21 = int_to_ptr.vmem [resolvable:$true] %s20
      %23 = dma.hbm_to_vmem [thread:$0]  %s1, 256, %s21, [#allocation4]
    $region9: #{tpu_custom_call.1} parent=1 // pred_fallthru
      _
    // Predicated region
    $region10: #{tpu_custom_call.1} parent=1 // pred_check
      _
    $region11: #{tpu_custom_call.1} parent=1 // pred_check_branch
      %25 = sbr.rel (0) target = $region13
    $region12: #{tpu_custom_call.1} parent=1 // pred_region
      %s27 = ssub.s32 256, 256
      %28 = vsyncadd [#allocation7], %s27
      %s30 = sshll.u32 [#allocation6], 4
      %s31 = int_to_ptr.vmem [resolvable:$true] %s30
      %33 = dma.hbm_to_vmem [thread:$0]  %s2, 256, %s31, [#allocation7]
    $region13: #{tpu_custom_call.1} parent=1 // pred_fallthru
      _
    // Predicated region
    $region14: #{tpu_custom_call.1} parent=1 // pred_check
      _
    $region15: #{tpu_custom_call.1} parent=1 // pred_check_branch
      %35 = sbr.rel (0) target = $region17
    $region16: #{tpu_custom_call.1} parent=1 // pred_region
      %36 = dma.done [#allocation4], 256
    $region17: #{tpu_custom_call.1} parent=1 // pred_fallthru
      _
    // Predicated region
    $region18: #{tpu_custom_call.1} parent=1 // pred_check
      _
    $region19: #{tpu_custom_call.1} parent=1 // pred_check_branch
      %38 = sbr.rel (0) target = $region21
    $region20: #{tpu_custom_call.1} parent=1 // pred_region
      %39 = dma.done [#allocation7], 256
    $region21: #{tpu_custom_call.1} parent=1 // pred_fallthru
      _
    %s40 = sld [smem:[#allocation2]]
    %v41 = vld [vmem:[#allocation3] sm:$0xff]
    %v42 = vld [vmem:[#allocation3 + $0x8] sm:$0xff]
    %v43 = vld [vmem:[#allocation6] sm:$0xff]
    %v44 = vld [vmem:[#allocation6 + $0x8] sm:$0xff]
    %v45 = vstv %s40
    %v46 = vmul.f32 %v45, %v43
    %v47 = vmul.f32 %v45, %v44
    %v48 = vadd.f32 %v41, %v46
    %v49 = vadd.f32 %v42, %v47
    %50 = vst [vmem:[#allocation8] sm:$0xff] %v48
    %51 = vst [vmem:[#allocation8 + $0x8] sm:$0xff] %v49
    // Predicated region
    $region22: #{tpu_custom_call.1} parent=1 // pred_check
      _
    $region23: #{tpu_custom_call.1} parent=1 // pred_check_branch
      %53 = sbr.rel (0) target = $region25
    $region24: #{tpu_custom_call.1} parent=1 // pred_region
      %s55 = ssub.s32 256, 256
      %56 = vsyncadd [#allocation5], %s55
      %s58 = sshll.u32 [#allocation8], 4
      %s59 = int_to_ptr.vmem [resolvable:$true] %s58
      %61 = dma.vmem_to_hbm [thread:$0]  %s59, 256, %s3, [#allocation5]
    $region25: #{tpu_custom_call.1} parent=1 // pred_fallthru
      _
    // Predicated region
    $region26: #{tpu_custom_call.1} parent=1 // pred_check
      _
    $region27: #{tpu_custom_call.1} parent=1 // pred_check_branch
      %63 = sbr.rel (0) target = $region29
    $region28: #{tpu_custom_call.1} parent=1 // pred_region
      %64 = dma.done [#allocation5], 256
    $region29: #{tpu_custom_call.1} parent=1 // pred_fallthru
      _
    %65 = vsyncpa [#allocation4], 1
    %66 = vsyncpa [#allocation7], 1
    %67 = vsyncpa [#allocation5], 1

</llo_original>
